<compile_context>
chip_gen: v6e
topology: v6e:2x2x1
jax: 0.10.0
libtpu: 0.0.40
codegen_flags: <defaults>
</compile_context>

<pallas_src>
import jax
import jax.numpy as jnp
from jax import lax
from jax.experimental import pallas as pl
from jax.experimental.pallas import tpu as pltpu

EPS = 1e-6  # matches nn.CosineSimilarity(dim=0, eps=1e-06)


def graphsage_score_kernel(adj_ref, feat_ref, self_ref, wself_ref, wneigh_ref,
                           out_ref, acc_ref):
    """Fused GraphSAGE encoder (q & u batched, node-major) + cosine score.

    adj_ref    : [2Np, tv]  row-normalized adjacency tile (q rows then u rows)
    feat_ref   : [tv, Fp]   feature-table tile (V streamed on the grid)
    self_ref   : [2Np, Fp]  self features (q rows then u rows), resident
    wself_ref  : [Fp, E]    W_self.T, resident
    wneigh_ref : [Fp, E]    W_neigh.T, resident
    out_ref    : [Np, 1]    scores (tiny; masked store is negligible)
    acc_ref    : [2Np, Fp]  f32 VMEM accumulator for the neighbor mean
    """
    k = pl.program_id(0)

    # MeanAggregator: neigh_mean += adj_tile @ feat_tile  (lane axis = F).
    part = jnp.dot(adj_ref[...], feat_ref[...],
                   preferred_element_type=jnp.float32)

    @pl.when(k == 0)
    def _init():
        acc_ref[...] = part          # first tile: direct store, no zero-fill

    @pl.when(k > 0)
    def _accum():
        acc_ref[...] = acc_ref[...] + part

    @pl.when(k == pl.num_programs(0) - 1)
    def _finalize():
        # Encoder: ReLU(self @ Wself.T + neigh_mean @ Wneigh.T) -> [2Np, E].
        # (Two Fp-deep matmuls == one 2Fp-deep contraction; lane axis = E.)
        emb = jnp.maximum(
            jnp.dot(self_ref[...], wself_ref[...],
                    preferred_element_type=jnp.float32)
            + jnp.dot(acc_ref[...].astype(wneigh_ref.dtype), wneigh_ref[...],
                      preferred_element_type=jnp.float32),
            0.0)

        np_rows = out_ref.shape[0]
        q = emb[:np_rows]            # [Np, E]
        u = emb[np_rows:]            # [Np, E]

        # CosineSimilarity over the embedding axis (PyTorch dim=0) -> [Np, 1].
        dot = jnp.sum(q * u, axis=1, keepdims=True)
        nq2 = jnp.sum(q * q, axis=1, keepdims=True)
        nu2 = jnp.sum(u * u, axis=1, keepdims=True)
        # rsqrt(max(nq2*nu2, eps^2)) == 1 / max(||q||*||u||, eps)  (EUP slot).
        inv = lax.rsqrt(jnp.maximum(nq2 * nu2, EPS * EPS))
        out_ref[...] = (dot * inv + 1.0) * 0.5


def _round_up(x, m):
    return ((x + m - 1) // m) * m


def _vmem_budget_bytes():
    """Per-generation VMEM budget: ~75% of physical, capped at 100 MiB."""
    cap = 64 * 1024 * 1024                      # safe fallback (v7x physical)
    try:
        info = pltpu.get_tpu_info()
        cap = int(getattr(info, "vmem_capacity_bytes", cap)) or cap
    except Exception:
        pass
    return min(cap * 3 // 4, 100 * 1024 * 1024)


def _pick_v_tile(v, f_pad, n2, dtype_bytes, vmem_budget, resident_bytes):
    """Largest 128-multiple V tile whose double-buffered stream fits the VMEM
    budget and whose zero-padding of V stays modest (<~25%)."""
    v128 = _round_up(v, 128)
    for cand in (2048, 1024, 512, 256, 128):
        stream = 2 * (cand * f_pad + n2 * cand) * dtype_bytes   # double-buffered
        if resident_bytes + stream > vmem_budget - (2 << 20):
            continue
        if _round_up(v, cand) > v128 * 5 // 4:
            continue
        return cand
    return 128


def _pad2(x, rows, cols):
    r, c = x.shape
    return jnp.pad(x, ((0, rows - r), (0, cols - c)))


def supervised_graphsage_forward(adj_q, adj_u, feat, self_q, self_u,
                                 w_self, w_neigh,
                                 compute_dtype=jnp.bfloat16):
    """Returns scores.t() -> 1-D array of shape [N]."""
    n, v = adj_q.shape
    f = feat.shape[1]
    e = w_self.shape[0]

    dtype_bytes = jnp.dtype(compute_dtype).itemsize
    align = 16 if dtype_bytes == 2 else 8
    n_pad = _round_up(n, align)          # q/u row split stays sublane-aligned
    f_pad = _round_up(f, align)
    n2 = 2 * n_pad

    vmem_budget = _vmem_budget_bytes()
    resident_bytes = (2 * (n2 * f_pad + 2 * f_pad * e) * dtype_bytes  # self2 + W.T's (2-buffered)
                      + n2 * f_pad * 4                                # f32 accumulator
                      + 2 * n_pad * 4)                                # scores
    tv = _pick_v_tile(v, f_pad, n2, dtype_bytes, vmem_budget, resident_bytes)
    v_pad = _round_up(v, tv)
    n_k = v_pad // tv

    # Trace-time layout plumbing (node-major; only the small weight is transposed).
    adj2 = jnp.concatenate(
        [_pad2(adj_q, n_pad, v_pad), _pad2(adj_u, n_pad, v_pad)],
        axis=0).astype(compute_dtype)                      # [2Np, Vp]
    self2 = jnp.concatenate(
        [_pad2(self_q, n_pad, f_pad), _pad2(self_u, n_pad, f_pad)],
        axis=0).astype(compute_dtype)                      # [2Np, Fp]
    feat_p = _pad2(feat, v_pad, f_pad).astype(compute_dtype)       # [Vp, Fp]
    wself_t = _pad2(w_self.T, f_pad, e).astype(compute_dtype)      # [Fp, E]
    wneigh_t = _pad2(w_neigh.T, f_pad, e).astype(compute_dtype)    # [Fp, E]

    flops = (2 * n2 * v_pad * f_pad            # neighbor aggregation
             + 2 * 2 * n2 * f_pad * e          # two encoder matmuls
             + 10 * n_pad * e)                 # cosine epilogue (rough)
    bytes_accessed = (dtype_bytes * (n2 * v_pad + v_pad * f_pad
                                     + n2 * f_pad + 2 * f_pad * e)
                      + 4 * n_pad)

    grid_spec = pltpu.PrefetchScalarGridSpec(
        num_scalar_prefetch=0,
        grid=(n_k,),
        in_specs=[
            pl.BlockSpec((n2, tv), lambda k: (0, k)),       # adjacency tile
            pl.BlockSpec((tv, f_pad), lambda k: (k, 0)),    # feature-table tile
            pl.BlockSpec((n2, f_pad), lambda k: (0, 0)),    # self feats (resident)
            pl.BlockSpec((f_pad, e), lambda k: (0, 0)),     # W_self.T (resident)
            pl.BlockSpec((f_pad, e), lambda k: (0, 0)),     # W_neigh.T (resident)
        ],
        out_specs=pl.BlockSpec((n_pad, 1), lambda k: (0, 0)),
        scratch_shapes=[pltpu.VMEM((n2, f_pad), jnp.float32)],
    )

    scores_col = pl.pallas_call(
        graphsage_score_kernel,
        grid_spec=grid_spec,
        out_shape=jax.ShapeDtypeStruct((n_pad, 1), jnp.float32),
        compiler_params=pltpu.CompilerParams(
            dimension_semantics=("arbitrary",),   # V is a reduction axis
            vmem_limit_bytes=int(vmem_budget),
        ),
        cost_estimate=pl.CostEstimate(
            flops=int(flops), transcendentals=int(n_pad),
            bytes_accessed=int(bytes_accessed)),
    )(adj2, feat_p, self2, wself_t, wneigh_t)

    # scores.t() on a 1-D tensor is a no-op -> return [N] (padding sliced off).
    return scores_col[:n, 0]


def _reference_forward(adj_q, adj_u, feat, self_q, self_u, w_self, w_neigh,
                       compute_dtype=jnp.float32):
    """Pure-JAX reference. `compute_dtype` mirrors the kernel's input cast."""
    c = lambda x: x.astype(compute_dtype)

    def encode(adj, sf):
        neigh = jnp.dot(c(adj), c(feat), preferred_element_type=jnp.float32,
                        precision=lax.Precision.HIGHEST)
        return jnp.maximum(
            jnp.dot(c(sf), c(w_self.T), preferred_element_type=jnp.float32,
                    precision=lax.Precision.HIGHEST)
            + jnp.dot(c(neigh), c(w_neigh.T), preferred_element_type=jnp.float32,
                      precision=lax.Precision.HIGHEST),
            0.0)

    q = encode(adj_q, self_q)
    u = encode(adj_u, self_u)
    dot = jnp.sum(q * u, axis=1)
    denom = jnp.maximum(jnp.linalg.norm(q, axis=1) * jnp.linalg.norm(u, axis=1),
                        EPS)
    return (dot / denom + 1.0) / 2.0


if __name__ == "__main__":
    # Small, deterministic synthetic graph / parameters.
    V = 64   # number of graph nodes
    F = 32   # raw feature dim
    E = 64   # embed dim (Encoder.embed_dim)
    N = 8    # batch of (question, user) node pairs

    key = jax.random.PRNGKey(0)
    k_feat, k_w, k_adj, k_q, k_u = jax.random.split(key, 5)

    feat = jax.random.normal(k_feat, (V, F), dtype=jnp.float32)

    # Encoder weight [E, 2F]: first half acts on self feats, second half on the
    # neighbor mean (matches torch.cat([self_feats, neigh_feats], dim=1)).
    w_full = jax.random.normal(k_w, (E, 2 * F), dtype=jnp.float32) / jnp.sqrt(2.0 * F)
    w_self = w_full[:, :F]
    w_neigh = w_full[:, F:]

    # Random adjacency (MeanAggregator == row-normalized adjacency @ features).
    adj_mask = (jax.random.uniform(k_adj, (V, V)) > 0.7).astype(jnp.float32)
    adj_mask = adj_mask + jnp.eye(V, dtype=jnp.float32)   # guarantee >=1 neighbor
    adj_norm = adj_mask / jnp.sum(adj_mask, axis=1, keepdims=True)

    questions = jax.random.randint(k_q, (N,), 0, V)
    users = jax.random.randint(k_u, (N,), 0, V)

    adj_q = adj_norm[questions]      # [N, V]
    adj_u = adj_norm[users]          # [N, V]
    self_q = feat[questions]         # [N, F]
    self_u = feat[users]             # [N, F]

    scores = supervised_graphsage_forward(adj_q, adj_u, feat, self_q, self_u,
                                          w_self, w_neigh)
    scores = jax.block_until_ready(scores)

    # TODO(synk): the PyTorch forward's isnan(...) -> exit(1) guards are
    # host-side control flow; asserted here instead of exiting.
    assert not bool(jnp.isnan(scores).any()), "scores contain NaN"

    # Check against a reference that mirrors the kernel's bf16 input cast
    # (tight tolerance) and against a pure-f32 reference (loose tolerance,
    # bounds the bf16 rounding of the datapath).
    ref_matched = _reference_forward(adj_q, adj_u, feat, self_q, self_u,
                                     w_self, w_neigh,
                                     compute_dtype=jnp.bfloat16)
    ref_f32 = _reference_forward(adj_q, adj_u, feat, self_q, self_u,
                                 w_self, w_neigh,
                                 compute_dtype=jnp.float32)
    assert jnp.allclose(scores, ref_matched, atol=5e-3, rtol=5e-3), (scores, ref_matched)
    assert jnp.allclose(scores, ref_f32, atol=3e-2, rtol=0), (scores, ref_f32)

    print("KERNEL_OK")
</pallas_src>

<mosaic_0001>
module attributes {stable_mosaic.version = 11 : i64} {
  func.func @graphsage_score_kernel(%arg0: i32, %arg1: memref<32x128xbf16, #tpu.memory_space<vmem>>, %arg2: memref<128x32xbf16, #tpu.memory_space<vmem>>, %arg3: memref<32x32xbf16, #tpu.memory_space<vmem>>, %arg4: memref<32x64xbf16, #tpu.memory_space<vmem>>, %arg5: memref<32x64xbf16, #tpu.memory_space<vmem>>, %arg6: memref<16x1xf32, #tpu.memory_space<vmem>>, %arg7: memref<32x32xf32, #tpu.memory_space<vmem>>) attributes {dimension_semantics = [#tpu.dimension_semantics<arbitrary>], iteration_bounds = array<i64: 1>, scalar_prefetch = 0 : i64, scratch_operands = 1 : i64, tpu.core_type = #tpu.core_type<tc>, window_params = [{transform_indices = @transform_0, window_bounds = array<i64: 32, 128>}, {transform_indices = @transform_1, window_bounds = array<i64: 128, 32>}, {pipeline_mode = #tpu.pipeline_mode<synchronous>, transform_indices = @transform_2, window_bounds = array<i64: 32, 32>}, {pipeline_mode = #tpu.pipeline_mode<synchronous>, transform_indices = @transform_3, window_bounds = array<i64: 32, 64>}, {pipeline_mode = #tpu.pipeline_mode<synchronous>, transform_indices = @transform_4, window_bounds = array<i64: 32, 64>}, {pipeline_mode = #tpu.pipeline_mode<synchronous>, transform_indices = @transform_5, window_bounds = array<i64: 16, 1>}]} {
    %c0 = arith.constant 0 : index
    %c0_0 = arith.constant 0 : index
    %0 = vector.load %arg1[%c0, %c0_0] : memref<32x128xbf16, #tpu.memory_space<vmem>>, vector<32x128xbf16>
    %c0_1 = arith.constant 0 : index
    %c0_2 = arith.constant 0 : index
    %1 = vector.load %arg2[%c0_1, %c0_2] : memref<128x32xbf16, #tpu.memory_space<vmem>>, vector<128x32xbf16>
    %cst = arith.constant dense<0.000000e+00> : vector<32x32xf32>
    %2 = tpu.matmul %0, %1, %cst {dimension_numbers = #tpu.dot_dimension_numbers<[1], [0], [0], [1], [0, 0, 1, 1], [], []>} : vector<32x128xbf16>, vector<128x32xbf16>, vector<32x32xf32> -> vector<32x32xf32>
    %c0_i32 = arith.constant 0 : i32
    %3 = arith.cmpi eq, %arg0, %c0_i32 : i32
    %4 = arith.extui %3 : i1 to i32
    %c0_i32_3 = arith.constant 0 : i32
    %5 = arith.cmpi ne, %4, %c0_i32_3 : i32
    scf.if %5 {
      %c0_8 = arith.constant 0 : index
      %c0_9 = arith.constant 0 : index
      %12 = vector.load %arg7[%c0_8, %c0_9] : memref<32x32xf32, #tpu.memory_space<vmem>>, vector<32x32xf32>
      tpu.vector_store %arg7[%c0_8, %c0_9], %2 {strides = array<i32>} : memref<32x32xf32, #tpu.memory_space<vmem>>, vector<32x32xf32>,
    } else {
    }
    %c0_i32_4 = arith.constant 0 : i32
    %6 = arith.cmpi sgt, %arg0, %c0_i32_4 : i32
    %7 = arith.extui %6 : i1 to i32
    %c0_i32_5 = arith.constant 0 : i32
    %8 = arith.cmpi ne, %7, %c0_i32_5 : i32
    scf.if %8 {
      %c0_8 = arith.constant 0 : index
      %c0_9 = arith.constant 0 : index
      %12 = vector.load %arg7[%c0_8, %c0_9] : memref<32x32xf32, #tpu.memory_space<vmem>>, vector<32x32xf32>
      %13 = arith.addf %12, %2 : vector<32x32xf32>
      %c0_10 = arith.constant 0 : index
      %c0_11 = arith.constant 0 : index
      %14 = vector.load %arg7[%c0_10, %c0_11] : memref<32x32xf32, #tpu.memory_space<vmem>>, vector<32x32xf32>
      tpu.vector_store %arg7[%c0_10, %c0_11], %13 {strides = array<i32>} : memref<32x32xf32, #tpu.memory_space<vmem>>, vector<32x32xf32>,
    } else {
    }
    %c0_i32_6 = arith.constant 0 : i32
    %9 = arith.cmpi eq, %arg0, %c0_i32_6 : i32
    %10 = arith.extui %9 : i1 to i32
    %c0_i32_7 = arith.constant 0 : i32
    %11 = arith.cmpi ne, %10, %c0_i32_7 : i32
    scf.if %11 {
      %c0_8 = arith.constant 0 : index
      %c0_9 = arith.constant 0 : index
      %12 = vector.load %arg3[%c0_8, %c0_9] : memref<32x32xbf16, #tpu.memory_space<vmem>>, vector<32x32xbf16>
      %c0_10 = arith.constant 0 : index
      %c0_11 = arith.constant 0 : index
      %13 = vector.load %arg4[%c0_10, %c0_11] : memref<32x64xbf16, #tpu.memory_space<vmem>>, vector<32x64xbf16>
      %cst_12 = arith.constant dense<0.000000e+00> : vector<32x64xf32>
      %14 = tpu.matmul %12, %13, %cst_12 {dimension_numbers = #tpu.dot_dimension_numbers<[1], [0], [0], [1], [0, 0, 1, 1], [], []>} : vector<32x32xbf16>, vector<32x64xbf16>, vector<32x64xf32> -> vector<32x64xf32>
      %c0_13 = arith.constant 0 : index
      %c0_14 = arith.constant 0 : index
      %15 = vector.load %arg7[%c0_13, %c0_14] : memref<32x32xf32, #tpu.memory_space<vmem>>, vector<32x32xf32>
      %16 = arith.truncf %15 : vector<32x32xf32> to vector<32x32xbf16>
      %c0_15 = arith.constant 0 : index
      %c0_16 = arith.constant 0 : index
      %17 = vector.load %arg5[%c0_15, %c0_16] : memref<32x64xbf16, #tpu.memory_space<vmem>>, vector<32x64xbf16>
      %cst_17 = arith.constant dense<0.000000e+00> : vector<32x64xf32>
      %18 = tpu.matmul %16, %17, %cst_17 {dimension_numbers = #tpu.dot_dimension_numbers<[1], [0], [0], [1], [0, 0, 1, 1], [], []>} : vector<32x32xbf16>, vector<32x64xbf16>, vector<32x64xf32> -> vector<32x64xf32>
      %19 = arith.addf %14, %18 : vector<32x64xf32>
      %cst_18 = arith.constant 0.000000e+00 : f32
      %20 = vector.broadcast %cst_18 : f32 to vector<32x64xf32>
      %21 = arith.maximumf %19, %20 : vector<32x64xf32>
      %22 = vector.extract_strided_slice %21 {offsets = [0, 0], sizes = [16, 64], strides = [1, 1]} : vector<32x64xf32> to vector<16x64xf32>
      %23 = vector.extract_strided_slice %21 {offsets = [16, 0], sizes = [16, 64], strides = [1, 1]} : vector<32x64xf32> to vector<16x64xf32>
      %24 = arith.mulf %22, %23 : vector<16x64xf32>
      %cst_19 = arith.constant dense<0.000000e+00> : vector<16xf32>
      %25 = vector.multi_reduction <add>, %24, %cst_19 [1] : vector<16x64xf32> to vector<16xf32>
      %26 = vector.shape_cast %25 : vector<16xf32> to vector<16x1xf32>
      %27 = arith.mulf %22, %22 : vector<16x64xf32>
      %cst_20 = arith.constant dense<0.000000e+00> : vector<16xf32>
      %28 = vector.multi_reduction <add>, %27, %cst_20 [1] : vector<16x64xf32> to vector<16xf32>
      %29 = vector.shape_cast %28 : vector<16xf32> to vector<16x1xf32>
      %30 = arith.mulf %23, %23 : vector<16x64xf32>
      %cst_21 = arith.constant dense<0.000000e+00> : vector<16xf32>
      %31 = vector.multi_reduction <add>, %30, %cst_21 [1] : vector<16x64xf32> to vector<16xf32>
      %32 = vector.shape_cast %31 : vector<16xf32> to vector<16x1xf32>
      %33 = arith.mulf %29, %32 : vector<16x1xf32>
      %cst_22 = arith.constant 9.99999996E-13 : f32
      %34 = vector.broadcast %cst_22 : f32 to vector<16x1xf32>
      %35 = arith.maximumf %33, %34 : vector<16x1xf32>
      %36 = math.rsqrt %35 : vector<16x1xf32>
      %37 = arith.mulf %26, %36 : vector<16x1xf32>
      %cst_23 = arith.constant 1.000000e+00 : f32
      %38 = vector.broadcast %cst_23 : f32 to vector<16x1xf32>
      %39 = arith.addf %37, %38 : vector<16x1xf32>
      %cst_24 = arith.constant 5.000000e-01 : f32
      %40 = vector.broadcast %cst_24 : f32 to vector<16x1xf32>
      %41 = arith.mulf %39, %40 : vector<16x1xf32>
      %c0_25 = arith.constant 0 : index
      %c0_26 = arith.constant 0 : index
      %42 = vector.load %arg6[%c0_25, %c0_26] : memref<16x1xf32, #tpu.memory_space<vmem>>, vector<16x1xf32>
      tpu.vector_store %arg6[%c0_25, %c0_26], %41 {strides = array<i32>} : memref<16x1xf32, #tpu.memory_space<vmem>>, vector<16x1xf32>,
    } else {
    }
    return
  }
  func.func @transform_0(%arg0: i32) -> (i32, i32) {
    %c0_i32 = arith.constant 0 : i32
    %c0_i32_0 = arith.constant 0 : i32
    return %c0_i32, %arg0 : i32, i32
  }
  func.func @transform_1(%arg0: i32) -> (i32, i32) {
    %c0_i32 = arith.constant 0 : i32
    %c0_i32_0 = arith.constant 0 : i32
    return %arg0, %c0_i32 : i32, i32
  }
  func.func @transform_2(%arg0: i32) -> (i32, i32) {
    %c0_i32 = arith.constant 0 : i32
    %c0_i32_0 = arith.constant 0 : i32
    %c0_i32_1 = arith.constant 0 : i32
    return %c0_i32, %c0_i32_0 : i32, i32
  }
  func.func @transform_3(%arg0: i32) -> (i32, i32) {
    %c0_i32 = arith.constant 0 : i32
    %c0_i32_0 = arith.constant 0 : i32
    %c0_i32_1 = arith.constant 0 : i32
    return %c0_i32, %c0_i32_0 : i32, i32
  }
  func.func @transform_4(%arg0: i32) -> (i32, i32) {
    %c0_i32 = arith.constant 0 : i32
    %c0_i32_0 = arith.constant 0 : i32
    %c0_i32_1 = arith.constant 0 : i32
    return %c0_i32, %c0_i32_0 : i32, i32
  }
  func.func @transform_5(%arg0: i32) -> (i32, i32) {
    %c0_i32 = arith.constant 0 : i32
    %c0_i32_0 = arith.constant 0 : i32
    %c0_i32_1 = arith.constant 0 : i32
    return %c0_i32, %c0_i32_0 : i32, i32
  }
}

</mosaic_0001>

<llo_original>
// kernel: tpu_custom_call.1
$region0: #{tpu_custom_call.1}
  #allocation0 [shape = 'u32[]', space=smem, size = 0x4, offset = 0x4, fixed_abs, tag = 'smem constant byte address 0x4 - core index']
  #allocation1 [shape = 'u32[144,128]{1,0:T(1,128)}', space=vmem, size = 0x12000, scoped, tag = 'internal scratch']
  #allocation2 [shape = 'f32[32,32]{1,0:T(8,128)}', space=vmem, size = 0x4000, scoped, tag = 'scratch operand']
  %s0 = inlined_call_operand.vmem [shape: bf16[32,128], index: 0, kind: input, shape index: {}]
  %s1 = inlined_call_operand.vmem [shape: bf16[128,32], index: 1, kind: input, shape index: {}]
  %s2 = inlined_call_operand.vmem [shape: bf16[32,32], index: 2, kind: input, shape index: {}]
  %s3 = inlined_call_operand.vmem [shape: bf16[32,64], index: 3, kind: input, shape index: {}]
  %s4 = inlined_call_operand.vmem [shape: bf16[32,64], index: 4, kind: input, shape index: {}]
  %s5 = inlined_call_operand.vmem [shape: f32[16,1], index: 5, kind: output, shape index: {}]
  %s6 = sld [smem:[#allocation0]]
  $region42: #{tpu_custom_call.1} parent=0
    _
  %s8 = ssub.s32 1, %s6
  %s9 = scalar_select 0, %s8, %s6
  // Predicated region
  $region2: #{tpu_custom_call.1} parent=0 // pred_check
    _
  $region3: #{tpu_custom_call.1} parent=0 // pred_check_branch
    %11 = sbr.rel (0) target = $region5
  $region4: #{tpu_custom_call.1} parent=0 // pred_region
    _
  $region5: #{tpu_custom_call.1} parent=0 // pred_fallthru
    _
  // Predicated region
  $region6: #{tpu_custom_call.1} parent=0 // pred_check
    _
  $region7: #{tpu_custom_call.1} parent=0 // pred_check_branch
    %13 = sbr.rel (0) target = $region9
  $region8: #{tpu_custom_call.1} parent=0 // pred_region
    _
  $region9: #{tpu_custom_call.1} parent=0 // pred_fallthru
    _
  // Predicated region
  $region10: #{tpu_custom_call.1} parent=0 // pred_check
    _
  $region11: #{tpu_custom_call.1} parent=0 // pred_check_branch
    %15 = sbr.rel (0) target = $region13
  $region12: #{tpu_custom_call.1} parent=0 // pred_region
    _
  $region13: #{tpu_custom_call.1} parent=0 // pred_fallthru
    _
  // Predicated region
  $region14: #{tpu_custom_call.1} parent=0 // pred_check
    _
  $region15: #{tpu_custom_call.1} parent=0 // pred_check_branch
    %17 = sbr.rel (0) target = $region17
  $region16: #{tpu_custom_call.1} parent=0 // pred_region
    _
  $region17: #{tpu_custom_call.1} parent=0 // pred_fallthru
    _
  // Predicated region
  $region18: #{tpu_custom_call.1} parent=0 // pred_check
    _
  $region19: #{tpu_custom_call.1} parent=0 // pred_check_branch
    %19 = sbr.rel (0) target = $region21
  $region20: #{tpu_custom_call.1} parent=0 // pred_region
    _
  $region21: #{tpu_custom_call.1} parent=0 // pred_fallthru
    _
  %v21 = vld [vmem:[%s0] sm:$0xf]
  %v22 = vld [vmem:[%s0 + $0x4] sm:$0xf]
  %v23 = vld [vmem:[%s0 + $0x8] sm:$0xf]
  %v24 = vld [vmem:[%s0 + $0xc] sm:$0xf]
  %v25 = vld [vmem:[%s1] sm:$0xf]
  %v26 = vld [vmem:[%s1 + $0x4] sm:$0xf]
  %v27 = vld [vmem:[%s1 + $0x8] sm:$0xf]
  %v28 = vld [vmem:[%s1 + $0xc] sm:$0xf]
  %v29 = vld [vmem:[%s1 + $0x10] sm:$0xf]
  %v30 = vld [vmem:[%s1 + $0x14] sm:$0xf]
  %v31 = vld [vmem:[%s1 + $0x18] sm:$0xf]
  %v32 = vld [vmem:[%s1 + $0x1c] sm:$0xf]
  %v33 = vld [vmem:[%s1 + $0x20] sm:$0xf]
  %v34 = vld [vmem:[%s1 + $0x24] sm:$0xf]
  %v35 = vld [vmem:[%s1 + $0x28] sm:$0xf]
  %v36 = vld [vmem:[%s1 + $0x2c] sm:$0xf]
  %v37 = vld [vmem:[%s1 + $0x30] sm:$0xf]
  %v38 = vld [vmem:[%s1 + $0x34] sm:$0xf]
  %v39 = vld [vmem:[%s1 + $0x38] sm:$0xf]
  %v40 = vld [vmem:[%s1 + $0x3c] sm:$0xf]
  %v45 = vunpack.c.l.b16 %v21
  %v46 = vunpack.c.l.b16 %v22
  %v47 = vunpack.c.l.b16 %v23
  %v48 = vunpack.c.l.b16 %v24
  %v49 = vpack.c.b16 %v46, %v45
  %v50 = vpack.c.b16 %v48, %v47
  %v69 = vunpack.c.l.b16 %v25
  %v70 = vunpack.c.l.b16 %v26
  %v71 = vunpack.c.l.b16 %v27
  %v72 = vunpack.c.l.b16 %v28
  %v73 = vunpack.c.l.b16 %v29
  %v74 = vunpack.c.l.b16 %v30
  %v75 = vunpack.c.l.b16 %v31
  %v76 = vunpack.c.l.b16 %v32
  %v77 = vunpack.c.l.b16 %v33
  %v78 = vunpack.c.l.b16 %v34
  %v79 = vunpack.c.l.b16 %v35
  %v80 = vunpack.c.l.b16 %v36
  %v81 = vunpack.c.l.b16 %v37
  %v82 = vunpack.c.l.b16 %v38
  %v83 = vunpack.c.l.b16 %v39
  %v84 = vunpack.c.l.b16 %v40
  %v85 = vpack.c.b16 %v70, %v69
  %v86 = vpack.c.b16 %v72, %v71
  %v87 = vpack.c.b16 %v74, %v73
  %v88 = vpack.c.b16 %v76, %v75
  %v89 = vpack.c.b16 %v78, %v77
  %v90 = vpack.c.b16 %v80, %v79
  %v91 = vpack.c.b16 %v82, %v81
  %v92 = vpack.c.b16 %v84, %v83
  %101 = vmatprep.subr.bf16.mxu0 0
  %102 = vmatpush1.bf16.msra.mxu0 %v92
  %103 = vmatprep.subr.bf16.mxu0 0
  %104 = vmatpush1.bf16.msra.mxu0 %v91
  %105 = vmatprep.subr.bf16.mxu0 0
  %106 = vmatpush1.bf16.msra.mxu0 %v90
  %107 = vmatprep.subr.bf16.mxu0 0
  %108 = vmatpush1.bf16.msra.mxu0 %v89
  %109 = vmatprep.subr.bf16.mxu0 0
  %110 = vmatpush1.bf16.msra.mxu0 %v88
  %111 = vmatprep.subr.bf16.mxu0 0
  %112 = vmatpush1.bf16.msra.mxu0 %v87
  %113 = vmatprep.subr.bf16.mxu0 0
  %114 = vmatpush1.bf16.msra.mxu0 %v86
  %115 = vmatprep.subr.bf16.mxu0 0
  %116 = vmatpush1.bf16.msra.mxu0 %v85
  %117 = vmatprep.subr.bf16.mxu0 0
  %118 = vmatpush2.bf16.msra.mxu0 0
  %119 = vmatprep.subr.bf16.mxu0 0
  %120 = vmatpush2.bf16.msra.mxu0 0
  %121 = vmatprep.subr.bf16.mxu0 0
  %122 = vmatpush2.bf16.msra.mxu0 0
  %123 = vmatprep.subr.bf16.mxu0 0
  %124 = vmatpush2.bf16.msra.mxu0 0
  %125 = vmatprep.subr.bf16.mxu0 0
  %126 = vmatpush2.bf16.msra.mxu0 0
  %127 = vmatprep.subr.bf16.mxu0 0
  %128 = vmatpush2.bf16.msra.mxu0 0
  %129 = vmatprep.subr.bf16.mxu0 0
  %130 = vmatpush2.bf16.msra.mxu0 0
  %131 = vmatprep.subr.bf16.mxu0 0
  %132 = vmatpush2.bf16.msra.mxu0 0
  %133 = vmatprep.mubr.bf16.mxu0 0
  %134 = vmatmul.mubr.bf16.gmra.mxu0 %v49
  %v135 = vpop.f32.mrf.mxu0
  %v136 = vadd.f32 0.0, %v135
  %v137 = vpop.f32.mrf.mxu0
  %v138 = vpop.f32.mrf.mxu0
  %v139 = vadd.f32 0.0, %v138
  %v140 = vpop.f32.mrf.mxu0
  %141 = vmatprep.mubr.bf16.mxu0 0
  %142 = vmatmul.mubr.bf16.gmra.mxu0 %v50
  %v143 = vpop.f32.mrf.mxu0
  %v144 = vadd.f32 0.0, %v143
  %v145 = vpop.f32.mrf.mxu0
  %v146 = vpop.f32.mrf.mxu0
  %v147 = vadd.f32 0.0, %v146
  %v148 = vpop.f32.mrf.mxu0
  %149 = vdwg.mxu0
  %p150 = scmp.eq.s32.totalorder 0, 0
  // Predicated region
  $region22: #{tpu_custom_call.1} parent=0 // pred_check
    %p151 = pneg %p150
  $region23: #{tpu_custom_call.1} parent=0 // pred_check_branch
    %153 = sbr.rel (%p151) target = $region25
  $region24: #{tpu_custom_call.1} parent=0 // pred_region
    %vm154 = vcmask 261120
    %155 = vst.msk [vmem:[#allocation2] sm:$0xff] %vm154, %v136
    %156 = vst.msk [vmem:[#allocation2 + $0x8] sm:$0xff] %vm154, %v139
    %157 = vst.msk [vmem:[#allocation2 + $0x10] sm:$0xff] %vm154, %v144
    %158 = vst.msk [vmem:[#allocation2 + $0x18] sm:$0xff] %vm154, %v147
  $region25: #{tpu_custom_call.1} parent=0 // pred_fallthru
    _
  %p159 = scmp.gt.s32.totalorder 0, 0
  // Predicated region
  $region26: #{tpu_custom_call.1} parent=0 // pred_check
    %p160 = pneg %p159
  $region27: #{tpu_custom_call.1} parent=0 // pred_check_branch
    %162 = sbr.rel (%p160) target = $region29
  $region28: #{tpu_custom_call.1} parent=0 // pred_region
    %v163 = vld [vmem:[#allocation2] sm:$0xff]
    %v164 = vld [vmem:[#allocation2 + $0x8] sm:$0xff]
    %v165 = vld [vmem:[#allocation2 + $0x10] sm:$0xff]
    %v166 = vld [vmem:[#allocation2 + $0x18] sm:$0xff]
    %v167 = vadd.f32 %v163, %v136
    %v168 = vadd.f32 %v164, %v139
    %v169 = vadd.f32 %v165, %v144
    %v170 = vadd.f32 %v166, %v147
    %vm171 = vcmask 261120
    %172 = vst.msk [vmem:[#allocation2] sm:$0xff] %vm171, %v167
    %173 = vst.msk [vmem:[#allocation2 + $0x8] sm:$0xff] %vm171, %v168
    %174 = vst.msk [vmem:[#allocation2 + $0x10] sm:$0xff] %vm171, %v169
    %175 = vst.msk [vmem:[#allocation2 + $0x18] sm:$0xff] %vm171, %v170
  $region29: #{tpu_custom_call.1} parent=0 // pred_fallthru
    _
  // Predicated region
  $region30: #{tpu_custom_call.1} parent=0 // pred_check
    %p176 = pneg %p150
  $region31: #{tpu_custom_call.1} parent=0 // pred_check_branch
    %178 = sbr.rel (%p176) target = $region33
  $region32: #{tpu_custom_call.1} parent=0 // pred_region
    %v179 = vld [vmem:[%s2] sm:$0xf]
    %v180 = vld [vmem:[%s2 + $0x4] sm:$0xf]
    %v181 = vld [vmem:[%s2 + $0x8] sm:$0xf]
    %v182 = vld [vmem:[%s2 + $0xc] sm:$0xf]
    %v183 = vld [vmem:[%s3] sm:$0xf]
    %v184 = vld [vmem:[%s3 + $0x4] sm:$0xf]
    %v185 = vld [vmem:[%s3 + $0x8] sm:$0xf]
    %v186 = vld [vmem:[%s3 + $0xc] sm:$0xf]
    %v187 = vld [vmem:[#allocation2] sm:$0xff]
    %v188 = vld [vmem:[#allocation2 + $0x8] sm:$0xff]
    %v189 = vld [vmem:[#allocation2 + $0x10] sm:$0xff]
    %v190 = vld [vmem:[#allocation2 + $0x18] sm:$0xff]
    %v191 = vpack.c.bf16 %v188, %v187
    %v192 = vpack.c.bf16 %v190, %v189
    %v193 = vld [vmem:[%s4] sm:$0xf]
    %v194 = vld [vmem:[%s4 + $0x4] sm:$0xf]
    %v195 = vld [vmem:[%s4 + $0x8] sm:$0xf]
    %v196 = vld [vmem:[%s4 + $0xc] sm:$0xf]
    %v201 = vunpack.c.l.b16 %v193
    %v202 = vunpack.c.l.b16 %v194
    %v203 = vunpack.c.l.b16 %v195
    %v204 = vunpack.c.l.b16 %v196
    %v205 = vpack.c.b16 %v202, %v201
    %v206 = vpack.c.b16 %v204, %v203
    %vm209 = vcmask 261120
    %v211 = vsel %vm209, %v191, 0
    %v214 = vsel %vm209, %v192, 0
    %216 = vmatprep.subr.bf16.mxu0 0
    %217 = vmatpush1.bf16.msra.mxu0 0
    %218 = vmatprep.subr.bf16.mxu0 0
    %219 = vmatpush1.bf16.msra.mxu0 0
    %220 = vmatprep.subr.bf16.mxu0 0
    %221 = vmatpush1.bf16.msra.mxu0 0
    %222 = vmatprep.subr.bf16.mxu0 0
    %223 = vmatpush1.bf16.msra.mxu0 0
    %224 = vmatprep.subr.bf16.mxu0 0
    %225 = vmatpush1.bf16.msra.mxu0 0
    %226 = vmatprep.subr.bf16.mxu0 0
    %227 = vmatpush1.bf16.msra.mxu0 0
    %228 = vmatprep.subr.bf16.mxu0 0
    %229 = vmatpush1.bf16.msra.mxu0 %v206
    %230 = vmatprep.subr.bf16.mxu0 0
    %231 = vmatpush1.bf16.msra.mxu0 %v205
    %232 = vmatprep.subr.bf16.mxu0 0
    %233 = vmatpush2.bf16.msra.mxu0 0
    %234 = vmatprep.subr.bf16.mxu0 0
    %235 = vmatpush2.bf16.msra.mxu0 0
    %236 = vmatprep.subr.bf16.mxu0 0
    %237 = vmatpush2.bf16.msra.mxu0 0
    %238 = vmatprep.subr.bf16.mxu0 0
    %239 = vmatpush2.bf16.msra.mxu0 0
    %240 = vmatprep.subr.bf16.mxu0 0
    %241 = vmatpush2.bf16.msra.mxu0 0
    %242 = vmatprep.subr.bf16.mxu0 0
    %243 = vmatpush2.bf16.msra.mxu0 0
    %244 = vmatprep.subr.bf16.mxu0 0
    %245 = vmatpush2.bf16.msra.mxu0 0
    %246 = vmatprep.subr.bf16.mxu0 0
    %247 = vmatpush2.bf16.msra.mxu0 0
    %248 = vmatprep.mubr.bf16.mxu0 0
    %249 = vmatmul.mubr.bf16.gmra.mxu0 %v211
    %v250 = vpop.f32.mrf.mxu0
    %v251 = vadd.f32 0.0, %v250
    %v252 = vpop.f32.mrf.mxu0
    %v253 = vpop.f32.mrf.mxu0
    %v254 = vadd.f32 0.0, %v253
    %v255 = vpop.f32.mrf.mxu0
    %256 = vmatprep.mubr.bf16.mxu0 0
    %257 = vmatmul.mubr.bf16.gmra.mxu0 %v214
    %v258 = vpop.f32.mrf.mxu0
    %v259 = vadd.f32 0.0, %v258
    %v260 = vpop.f32.mrf.mxu0
    %v261 = vpop.f32.mrf.mxu0
    %v262 = vadd.f32 0.0, %v261
    %v263 = vpop.f32.mrf.mxu0
    %264 = vdwg.mxu0
    %v269 = vunpack.c.l.b16 %v179
    %v270 = vunpack.c.l.b16 %v180
    %v271 = vunpack.c.l.b16 %v181
    %v272 = vunpack.c.l.b16 %v182
    %v273 = vpack.c.b16 %v270, %v269
    %v274 = vpack.c.b16 %v272, %v271
    %v279 = vunpack.c.l.b16 %v183
    %v280 = vunpack.c.l.b16 %v184
    %v281 = vunpack.c.l.b16 %v185
    %v282 = vunpack.c.l.b16 %v186
    %v283 = vpack.c.b16 %v280, %v279
    %v284 = vpack.c.b16 %v282, %v281
    %v288 = vsel %vm209, %v273, 0
    %v291 = vsel %vm209, %v274, 0
    %293 = vmatprep.subr.bf16.mxu0 0
    %294 = vmatpush1.bf16.msra.mxu0 0
    %295 = vmatprep.subr.bf16.mxu0 0
    %296 = vmatpush1.bf16.msra.mxu0 0
    %297 = vmatprep.subr.bf16.mxu0 0
    %298 = vmatpush1.bf16.msra.mxu0 0
    %299 = vmatprep.subr.bf16.mxu0 0
    %300 = vmatpush1.bf16.msra.mxu0 0
    %301 = vmatprep.subr.bf16.mxu0 0
    %302 = vmatpush1.bf16.msra.mxu0 0
    %303 = vmatprep.subr.bf16.mxu0 0
    %304 = vmatpush1.bf16.msra.mxu0 0
    %305 = vmatprep.subr.bf16.mxu0 0
    %306 = vmatpush1.bf16.msra.mxu0 %v284
    %307 = vmatprep.subr.bf16.mxu0 0
    %308 = vmatpush1.bf16.msra.mxu0 %v283
    %309 = vmatprep.subr.bf16.mxu0 0
    %310 = vmatpush2.bf16.msra.mxu0 0
    %311 = vmatprep.subr.bf16.mxu0 0
    %312 = vmatpush2.bf16.msra.mxu0 0
    %313 = vmatprep.subr.bf16.mxu0 0
    %314 = vmatpush2.bf16.msra.mxu0 0
    %315 = vmatprep.subr.bf16.mxu0 0
    %316 = vmatpush2.bf16.msra.mxu0 0
    %317 = vmatprep.subr.bf16.mxu0 0
    %318 = vmatpush2.bf16.msra.mxu0 0
    %319 = vmatprep.subr.bf16.mxu0 0
    %320 = vmatpush2.bf16.msra.mxu0 0
    %321 = vmatprep.subr.bf16.mxu0 0
    %322 = vmatpush2.bf16.msra.mxu0 0
    %323 = vmatprep.subr.bf16.mxu0 0
    %324 = vmatpush2.bf16.msra.mxu0 0
    %325 = vmatprep.mubr.bf16.mxu0 0
    %326 = vmatmul.mubr.bf16.gmra.mxu0 %v288
    %v327 = vpop.f32.mrf.mxu0
    %v328 = vadd.f32 %v251, %v327
    %v329 = vpop.f32.mrf.mxu0
    %v330 = vpop.f32.mrf.mxu0
    %v331 = vadd.f32 %v254, %v330
    %v332 = vpop.f32.mrf.mxu0
    %333 = vmatprep.mubr.bf16.mxu0 0
    %334 = vmatmul.mubr.bf16.gmra.mxu0 %v291
    %v335 = vpop.f32.mrf.mxu0
    %v336 = vadd.f32 %v259, %v335
    %v337 = vpop.f32.mrf.mxu0
    %v338 = vpop.f32.mrf.mxu0
    %v339 = vadd.f32 %v262, %v338
    %v340 = vpop.f32.mrf.mxu0
    %341 = vdwg.mxu0
    %v342 = vmax.f32 %v328, 0.0
    %v343 = vmax.f32 %v331, 0.0
    %v344 = vmax.f32 %v336, 0.0
    %v345 = vmax.f32 %v339, 0.0
    %v346 = vmul.f32 %v342, %v344
    %v347 = vmul.f32 %v343, %v345
    %vm348 = vcmask 523264
    %v349 = vsel %vm348, %v346, 0.0
    %350 = vadd.xlane.f32.xlu0 %v349
    %v351 = vpop.xlane.xlu0 %350
    %v352 = vsel %vm348, %v347, 0.0
    %353 = vadd.xlane.f32.xlu0 %v352
    %v354 = vpop.xlane.xlu0 %353
    %v355 = vmul.f32 %v342, %v342
    %v356 = vmul.f32 %v343, %v343
    %v357 = vsel %vm348, %v355, 0.0
    %358 = vadd.xlane.f32.xlu0 %v357
    %v359 = vpop.xlane.xlu0 %358
    %v360 = vsel %vm348, %v356, 0.0
    %361 = vadd.xlane.f32.xlu0 %v360
    %v362 = vpop.xlane.xlu0 %361
    %v363 = vmul.f32 %v344, %v344
    %v364 = vmul.f32 %v345, %v345
    %v365 = vsel %vm348, %v363, 0.0
    %366 = vadd.xlane.f32.xlu0 %v365
    %v367 = vpop.xlane.xlu0 %366
    %v368 = vsel %vm348, %v364, 0.0
    %369 = vadd.xlane.f32.xlu0 %v368
    %v370 = vpop.xlane.xlu0 %369
    %v371 = vmul.f32 %v359, %v367
    %v372 = vmul.f32 %v362, %v370
    %v373 = vmax.f32 %v371, 1e-12
    %v374 = vmax.f32 %v372, 1e-12
    %v375 = vrsqrt.pop %v373
    %v376 = vrsqrt.pop %v374
    %v377 = vmul.f32 %v351, %v375
    %v378 = vmul.f32 %v354, %v376
    %v379 = vadd.f32 %v377, 1.0
    %v380 = vadd.f32 %v378, 1.0
    %v381 = vmul.f32 %v379, 0.5
    %v382 = vmul.f32 %v380, 0.5
    %vm383 = vcmask 7168
    %384 = vst.msk [vmem:[%s5] sm:$0xff] %vm383, %v381
    %385 = vst.msk [vmem:[%s5 + $0x8] sm:$0xff] %vm383, %v382
  $region33: #{tpu_custom_call.1} parent=0 // pred_fallthru
    _
  // Predicated region
  $region34: #{tpu_custom_call.1} parent=0 // pred_check
    _
  $region35: #{tpu_custom_call.1} parent=0 // pred_check_branch
    %387 = sbr.rel (0) target = $region37
  $region36: #{tpu_custom_call.1} parent=0 // pred_region
    _
  $region37: #{tpu_custom_call.1} parent=0 // pred_fallthru
    _
  // Predicated region
  $region38: #{tpu_custom_call.1} parent=0 // pred_check
    _
  $region39: #{tpu_custom_call.1} parent=0 // pred_check_branch
    %389 = sbr.rel (0) target = $region41
  $region40: #{tpu_custom_call.1} parent=0 // pred_region
    _
  $region41: #{tpu_custom_call.1} parent=0 // pred_fallthru
    _

</llo_original>
